<compile_context>
chip_gen: v5e
topology: v5e:2x2
jax: 0.10.0
libtpu: 0.0.40
codegen_flags: <defaults>
</compile_context>

<pallas_src>
import math
import functools

import jax
import jax.numpy as jnp
from jax.experimental import pallas as pl
from jax.experimental.pallas import tpu as pltpu


# ----------------------------- fused Pallas kernel -----------------------------

def _fused_mha_lora_kernel(x_ref, wqkv_ref, bqkv_ref, wo_ref, o_ref, *, num_heads):
    """One batch element per grid step.  No lane slicing / transposes inside.

    x_ref:    (1, N, E)     activations for this batch element (bf16)
    wqkv_ref: (3H, E, Dh)   head-major merged weights: [q heads | k heads | v heads]
                            (q heads pre-scaled by 1/sqrt(Dh)), bf16
    bqkv_ref: (3H, 1, Dh)   head-major q/k/v biases (q pre-scaled), f32
    wo_ref:   (H, Dh, E)    head-major merged out-proj weight, bf16
    o_ref:    (1, N, E)     output
    """
    H = num_heads
    x = x_ref[0]                                               # (N, E) bf16
    N, E = x.shape

    # --- fused head-batched q/k/v projection (one batched MXU dot_general) ---
    x3 = jnp.broadcast_to(x, (3 * H, N, E))                    # major-dim replicate
    qkv = jnp.einsum("hne,hed->hnd", x3, wqkv_ref[...],
                     preferred_element_type=jnp.float32)       # (3H, N, Dh) f32
    qkv = qkv + bqkv_ref[...]

    # Major-axis slices are free (no lane relayout). Cast MXU operands to bf16.
    q = qkv[:H].astype(jnp.bfloat16)                           # (H, N, Dh)
    k = qkv[H:2 * H].astype(jnp.bfloat16)
    v = qkv[2 * H:].astype(jnp.bfloat16)

    # --- batched scaled dot-product attention over all heads at once ---
    s = jnp.einsum("hqd,hkd->hqk", q, k,
                   preferred_element_type=jnp.float32)         # (H, N, N) f32
    m = jnp.max(s, axis=-1, keepdims=True)                     # f32 softmax stats
    p = jnp.exp(s - m)                                         # f32 (EUP)
    l = jnp.sum(p, axis=-1, keepdims=True)                     # f32
    o = jnp.einsum("hqk,hkd->hqd", p.astype(jnp.bfloat16), v,
                   preferred_element_type=jnp.float32)         # (H, N, Dh) f32
    # Normalize the small (N, Dh) output, not the (N, N) scores.
    o = o * pl.reciprocal(l, approx=True)

    # --- out projection: batched over heads, then sum over the head axis ---
    # out = sum_h o_h @ Wo[:, h*Dh:(h+1)*Dh]^T  ==  proj(concat_heads(o))
    out_h = jnp.einsum("hqd,hde->hqe", o.astype(jnp.bfloat16), wo_ref[...],
                       preferred_element_type=jnp.float32)     # (H, N, E) f32
    o_ref[0] = jnp.sum(out_h, axis=0).astype(o_ref.dtype)      # proj has no bias


# ------------------------------ forward wrapper --------------------------------

def mha_lora_forward(x, params, num_heads, scaling):
    """x: (B, N, E) batch-first. Returns (B, N, E) (attn weights = None)."""
    B, N, E = x.shape
    H = num_heads
    Dh = E // H
    scale = 1.0 / math.sqrt(Dh)

    # LoRA merge once per call in XLA — exactly LinearLoRA.merge_lora_param().
    def w_eff(w, a, b):
        return w + scaling * (b @ a)                           # (E, E)

    wq = w_eff(params["wq"], params["aq"], params["Bq"]) * scale   # fold 1/sqrt(Dh)
    wk = w_eff(params["wk"], params["ak"], params["Bk"])
    wv = w_eff(params["wv"], params["av"], params["Bv"])
    wo = w_eff(params["wo"], params["ao"], params["Bo"])

    # Head-major weight layouts (heads on a leading/batch axis):
    #   head_in(W)[h] = W[h*Dh:(h+1)*Dh, :].T  -> y_h = x @ head_in(W)[h]
    def head_in(w):                                            # (E, E) -> (H, E, Dh)
        return w.reshape(H, Dh, E).transpose(0, 2, 1)

    wqkv_h = jnp.concatenate([head_in(wq), head_in(wk), head_in(wv)],
                             axis=0).astype(jnp.bfloat16)      # (3H, E, Dh) bf16
    bqkv_h = jnp.concatenate([
        (params["bq"] * scale).reshape(H, 1, Dh),
        params["bk"].reshape(H, 1, Dh),
        params["bv"].reshape(H, 1, Dh)], axis=0)               # (3H, 1, Dh) f32
    # wo_h[h] = Wo_eff[:, h*Dh:(h+1)*Dh].T  (consumes head h of the attn output)
    wo_h = wo.reshape(E, H, Dh).transpose(1, 2, 0).astype(jnp.bfloat16)  # (H, Dh, E)

    kern = functools.partial(_fused_mha_lora_kernel, num_heads=H)

    # Grid over batch; weight blocks are constant (0,..) so they are DMA'd once
    # and stay VMEM-resident.  (At large E, single-buffer them with
    # pipeline_mode=pl.Buffered(1) to halve their VMEM footprint on v7x.)
    return pl.pallas_call(
        kern,
        out_shape=jax.ShapeDtypeStruct((B, N, E), x.dtype),
        grid=(B,),
        in_specs=[
            pl.BlockSpec((1, N, E), lambda b: (b, 0, 0)),
            pl.BlockSpec((3 * H, E, Dh), lambda b: (0, 0, 0)),
            pl.BlockSpec((3 * H, 1, Dh), lambda b: (0, 0, 0)),
            pl.BlockSpec((H, Dh, E), lambda b: (0, 0, 0)),
        ],
        out_specs=pl.BlockSpec((1, N, E), lambda b: (b, 0, 0)),
        compiler_params=pltpu.CompilerParams(
            dimension_semantics=("parallel",),
            vmem_limit_bytes=16 * 1024 * 1024,   # resize for realistic E/N
        ),
    )(x.astype(jnp.bfloat16), wqkv_h, bqkv_h, wo_h)


# -------------------------------- references ------------------------------------

def ref_forward(x, params, num_heads, scaling):
    """Faithful pure-f32 port of the PyTorch forward (eval mode), including the
    permute(2,0,1,3)/view ordering around the output projection (no proj bias)."""
    B, N, E = x.shape
    H = num_heads
    Dh = E // H

    def lora_w(w, a, bb):
        return w + scaling * (bb @ a)

    q = x @ lora_w(params["wq"], params["aq"], params["Bq"]).T + params["bq"]
    k = x @ lora_w(params["wk"], params["ak"], params["Bk"]).T + params["bk"]
    v = x @ lora_w(params["wv"], params["av"], params["Bv"]).T + params["bv"]

    def heads(t):
        return t.reshape(B, N, H, Dh).transpose(0, 2, 1, 3)

    qh, kh, vh = heads(q), heads(k), heads(v)
    s = jnp.einsum("bhnd,bhmd->bhnm", qh, kh) / math.sqrt(Dh)
    p = jax.nn.softmax(s, axis=-1)
    o = jnp.einsum("bhnm,bhmd->bhnd", p, vh)                   # (B, H, N, Dh)
    o = o.transpose(2, 0, 1, 3).reshape(N * B, E)
    out = o @ lora_w(params["wo"], params["ao"], params["Bo"]).T
    return out.reshape(N, B, E).transpose(1, 0, 2)


def ref_forward_mixed(x, params, num_heads, scaling):
    """Same math, but mirrors the kernel's mixed precision (bf16 MXU operands,
    f32 accumulation / softmax stats) so it can be compared tightly."""
    B, N, E = x.shape
    H = num_heads
    Dh = E // H
    scale = 1.0 / math.sqrt(Dh)
    r16 = lambda t: t.astype(jnp.bfloat16).astype(jnp.float32)

    def lora_w(w, a, bb):
        return w + scaling * (bb @ a)

    wq = r16(lora_w(params["wq"], params["aq"], params["Bq"]) * scale)
    wk = r16(lora_w(params["wk"], params["ak"], params["Bk"]))
    wv = r16(lora_w(params["wv"], params["av"], params["Bv"]))
    wo = r16(lora_w(params["wo"], params["ao"], params["Bo"]))
    xr = r16(x)

    q = r16(xr @ wq.T + params["bq"] * scale)
    k = r16(xr @ wk.T + params["bk"])
    v = r16(xr @ wv.T + params["bv"])

    def heads(t):
        return t.reshape(B, N, H, Dh).transpose(0, 2, 1, 3)

    qh, kh, vh = heads(q), heads(k), heads(v)
    s = jnp.einsum("bhnd,bhmd->bhnm", qh, kh)
    m = jnp.max(s, axis=-1, keepdims=True)
    p = jnp.exp(s - m)
    l = jnp.sum(p, axis=-1, keepdims=True)
    o = jnp.einsum("bhnm,bhmd->bhnd", r16(p), vh) / l          # normalize after P.V
    attn = r16(o.transpose(0, 2, 1, 3).reshape(B, N, E))
    return attn @ wo.T


# ------------------------------------ main ---------------------------------------

if __name__ == "__main__":
    # Shapes consistent with the module: batch=2, seq=8, embed_dim=32,
    # num_heads=4 (head_dim=8), LoRA rank r=4, lora_alpha=1.
    B, N, E = 2, 8, 32
    num_heads = 4
    r = 4
    lora_alpha = 1
    scaling = lora_alpha / math.sqrt(r)   # module's convention: alpha / sqrt(r)

    key = jax.random.PRNGKey(0)
    keys = jax.random.split(key, 16)
    bound = 1.0 / math.sqrt(E)

    def unif(k, shape, b=bound):
        return jax.random.uniform(k, shape, jnp.float32, minval=-b, maxval=b)

    params = {
        # base linear weights/biases (nn.Linear default-style uniform init)
        "wq": unif(keys[0], (E, E)), "bq": unif(keys[1], (E,)),
        "wk": unif(keys[2], (E, E)), "bk": unif(keys[3], (E,)),
        "wv": unif(keys[4], (E, E)), "bv": unif(keys[5], (E,)),
        "wo": unif(keys[6], (E, E)),
        # LoRA A (r, E): kaiming-uniform(a=sqrt(5)) bound == 1/sqrt(E)
        "aq": unif(keys[7], (r, E)), "ak": unif(keys[8], (r, E)),
        "av": unif(keys[9], (r, E)), "ao": unif(keys[10], (r, E)),
        # LoRA B (E, r): zeros in the module init; small random values here so
        # the LoRA contribution is numerically exercised.
        "Bq": unif(keys[11], (E, r), 0.05), "Bk": unif(keys[12], (E, r), 0.05),
        "Bv": unif(keys[13], (E, r), 0.05), "Bo": unif(keys[14], (E, r), 0.05),
    }

    x = jax.random.normal(keys[15], (B, N, E), jnp.float32)

    out = mha_lora_forward(x, params, num_heads, scaling)
    out = jax.block_until_ready(out)
    assert out.shape == (B, N, E)

    # Tight check against a reference that mirrors the kernel's mixed precision
    # (only remaining deltas: accumulation order + EUP approximate reciprocal).
    ref_mixed = ref_forward_mixed(x, params, num_heads, scaling)
    err_mixed = float(jnp.max(jnp.abs(out - ref_mixed)))
    assert jnp.allclose(out, ref_mixed, atol=1e-2, rtol=1e-2), (
        f"mismatch vs mixed-precision reference (max abs err {err_mixed})")

    # Loose semantic check against the faithful pure-f32 port of the module;
    # tolerance covers the bf16 MXU-operand rounding requested by the perf review.
    ref_full = ref_forward(x, params, num_heads, scaling)
    err_full = float(jnp.max(jnp.abs(out - ref_full)))
    assert jnp.allclose(out, ref_full, atol=8e-2, rtol=8e-2), (
        f"mismatch vs pure-f32 reference (max abs err {err_full})")

    print("KERNEL_OK")
</pallas_src>

<mosaic_0001>
module attributes {stable_mosaic.version = 11 : i64} {
  func.func @_fused_mha_lora_kernel(%arg0: i32, %arg1: memref<1x8x32xbf16, #tpu.memory_space<vmem>>, %arg2: memref<12x32x8xbf16, #tpu.memory_space<vmem>>, %arg3: memref<12x1x8xf32, #tpu.memory_space<vmem>>, %arg4: memref<4x8x32xbf16, #tpu.memory_space<vmem>>, %arg5: memref<1x8x32xf32, #tpu.memory_space<vmem>>) attributes {dimension_semantics = [#tpu.dimension_semantics<parallel>], iteration_bounds = array<i64: 2>, scalar_prefetch = 0 : i64, scratch_operands = 0 : i64, tpu.core_type = #tpu.core_type<tc>, window_params = [{transform_indices = @transform_0, window_bounds = array<i64: 1, 8, 32>}, {pipeline_mode = #tpu.pipeline_mode<synchronous>, transform_indices = @transform_1, window_bounds = array<i64: 12, 32, 8>}, {pipeline_mode = #tpu.pipeline_mode<synchronous>, transform_indices = @transform_2, window_bounds = array<i64: 12, 1, 8>}, {pipeline_mode = #tpu.pipeline_mode<synchronous>, transform_indices = @transform_3, window_bounds = array<i64: 4, 8, 32>}, {transform_indices = @transform_4, window_bounds = array<i64: 1, 8, 32>}]} {
    %c0 = arith.constant 0 : index
    %c0_0 = arith.constant 0 : index
    %c0_1 = arith.constant 0 : index
    %0 = vector.load %arg1[%c0, %c0_0, %c0_1] : memref<1x8x32xbf16, #tpu.memory_space<vmem>>, vector<1x8x32xbf16>
    %1 = vector.shape_cast %0 : vector<1x8x32xbf16> to vector<8x32xbf16>
    %2 = vector.shape_cast %1 : vector<8x32xbf16> to vector<1x8x32xbf16>
    %3 = vector.broadcast %2 : vector<1x8x32xbf16> to vector<12x8x32xbf16>
    %c0_2 = arith.constant 0 : index
    %c0_3 = arith.constant 0 : index
    %c0_4 = arith.constant 0 : index
    %4 = vector.load %arg2[%c0_2, %c0_3, %c0_4] : memref<12x32x8xbf16, #tpu.memory_space<vmem>>, vector<12x32x8xbf16>
    "tpu.trace_start"() <{level = 10 : i32, message = "hne,hed->hnd"}> : () -> ()
    %cst = arith.constant dense<0.000000e+00> : vector<12x8x8xf32>
    %5 = tpu.matmul %3, %4, %cst {dimension_numbers = #tpu.dot_dimension_numbers<[2], [1], [1], [2], [0, 0, 0, 1, 1, 2], [0], [0]>} : vector<12x8x32xbf16>, vector<12x32x8xbf16>, vector<12x8x8xf32> -> vector<12x8x8xf32>
    "tpu.trace_stop"() : () -> ()
    %c0_5 = arith.constant 0 : index
    %c0_6 = arith.constant 0 : index
    %c0_7 = arith.constant 0 : index
    %6 = vector.load %arg3[%c0_5, %c0_6, %c0_7] : memref<12x1x8xf32, #tpu.memory_space<vmem>>, vector<12x1x8xf32>
    %7 = vector.broadcast %6 : vector<12x1x8xf32> to vector<12x8x8xf32>
    %8 = arith.addf %5, %7 : vector<12x8x8xf32>
    %9 = vector.extract_strided_slice %8 {offsets = [0, 0, 0], sizes = [4, 8, 8], strides = [1, 1, 1]} : vector<12x8x8xf32> to vector<4x8x8xf32>
    %10 = arith.truncf %9 : vector<4x8x8xf32> to vector<4x8x8xbf16>
    %11 = vector.extract_strided_slice %8 {offsets = [4, 0, 0], sizes = [4, 8, 8], strides = [1, 1, 1]} : vector<12x8x8xf32> to vector<4x8x8xf32>
    %12 = arith.truncf %11 : vector<4x8x8xf32> to vector<4x8x8xbf16>
    %13 = vector.extract_strided_slice %8 {offsets = [8, 0, 0], sizes = [4, 8, 8], strides = [1, 1, 1]} : vector<12x8x8xf32> to vector<4x8x8xf32>
    %14 = arith.truncf %13 : vector<4x8x8xf32> to vector<4x8x8xbf16>
    "tpu.trace_start"() <{level = 10 : i32, message = "hqd,hkd->hqk"}> : () -> ()
    %cst_8 = arith.constant dense<0.000000e+00> : vector<4x8x8xf32>
    %15 = tpu.matmul %10, %12, %cst_8 {dimension_numbers = #tpu.dot_dimension_numbers<[2], [2], [1], [1], [0, 0, 0, 1, 1, 1], [0], [0]>} : vector<4x8x8xbf16>, vector<4x8x8xbf16>, vector<4x8x8xf32> -> vector<4x8x8xf32>
    "tpu.trace_stop"() : () -> ()
    %cst_9 = arith.constant dense<0xFF800000> : vector<4x8xf32>
    %16 = vector.multi_reduction <maximumf>, %15, %cst_9 [2] : vector<4x8x8xf32> to vector<4x8xf32>
    %17 = vector.shape_cast %16 : vector<4x8xf32> to vector<4x8x1xf32>
    %18 = vector.broadcast %17 : vector<4x8x1xf32> to vector<4x8x8xf32>
    %19 = arith.subf %15, %18 : vector<4x8x8xf32>
    %20 = math.exp %19 : vector<4x8x8xf32>
    %cst_10 = arith.constant dense<0.000000e+00> : vector<4x8xf32>
    %21 = vector.multi_reduction <add>, %20, %cst_10 [2] : vector<4x8x8xf32> to vector<4x8xf32>
    %22 = vector.shape_cast %21 : vector<4x8xf32> to vector<4x8x1xf32>
    %23 = arith.truncf %20 : vector<4x8x8xf32> to vector<4x8x8xbf16>
    "tpu.trace_start"() <{level = 10 : i32, message = "hqk,hkd->hqd"}> : () -> ()
    %cst_11 = arith.constant dense<0.000000e+00> : vector<4x8x8xf32>
    %24 = tpu.matmul %23, %14, %cst_11 {dimension_numbers = #tpu.dot_dimension_numbers<[2], [1], [1], [2], [0, 0, 0, 1, 1, 2], [0], [0]>} : vector<4x8x8xbf16>, vector<4x8x8xbf16>, vector<4x8x8xf32> -> vector<4x8x8xf32>
    "tpu.trace_stop"() : () -> ()
    %25 = tpu.reciprocal %22 {approx = true} : vector<4x8x1xf32> -> vector<4x8x1xf32>
    %26 = vector.broadcast %25 : vector<4x8x1xf32> to vector<4x8x8xf32>
    %27 = arith.mulf %24, %26 : vector<4x8x8xf32>
    %28 = arith.truncf %27 : vector<4x8x8xf32> to vector<4x8x8xbf16>
    %c0_12 = arith.constant 0 : index
    %c0_13 = arith.constant 0 : index
    %c0_14 = arith.constant 0 : index
    %29 = vector.load %arg4[%c0_12, %c0_13, %c0_14] : memref<4x8x32xbf16, #tpu.memory_space<vmem>>, vector<4x8x32xbf16>
    "tpu.trace_start"() <{level = 10 : i32, message = "hqd,hde->hqe"}> : () -> ()
    %cst_15 = arith.constant dense<0.000000e+00> : vector<4x8x32xf32>
    %30 = tpu.matmul %28, %29, %cst_15 {dimension_numbers = #tpu.dot_dimension_numbers<[2], [1], [1], [2], [0, 0, 0, 1, 1, 2], [0], [0]>} : vector<4x8x8xbf16>, vector<4x8x32xbf16>, vector<4x8x32xf32> -> vector<4x8x32xf32>
    "tpu.trace_stop"() : () -> ()
    %cst_16 = arith.constant dense<0.000000e+00> : vector<8x32xf32>
    %31 = vector.multi_reduction <add>, %30, %cst_16 [0] : vector<4x8x32xf32> to vector<8x32xf32>
    %c0_17 = arith.constant 0 : index
    %c0_18 = arith.constant 0 : index
    %c0_19 = arith.constant 0 : index
    %32 = vector.load %arg5[%c0_17, %c0_18, %c0_19] : memref<1x8x32xf32, #tpu.memory_space<vmem>>, vector<1x8x32xf32>
    %33 = vector.shape_cast %32 : vector<1x8x32xf32> to vector<8x32xf32>
    %34 = vector.shape_cast %31 : vector<8x32xf32> to vector<1x8x32xf32>
    tpu.vector_store %arg5[%c0_17, %c0_18, %c0_19], %34 {strides = array<i32>} : memref<1x8x32xf32, #tpu.memory_space<vmem>>, vector<1x8x32xf32>,
    return
  }
  func.func @transform_0(%arg0: i32) -> (i32, i32, i32) {
    %c0_i32 = arith.constant 0 : i32
    %c0_i32_0 = arith.constant 0 : i32
    %c0_i32_1 = arith.constant 0 : i32
    return %arg0, %c0_i32, %c0_i32_0 : i32, i32, i32
  }
  func.func @transform_1(%arg0: i32) -> (i32, i32, i32) {
    %c0_i32 = arith.constant 0 : i32
    %c0_i32_0 = arith.constant 0 : i32
    %c0_i32_1 = arith.constant 0 : i32
    %c0_i32_2 = arith.constant 0 : i32
    return %c0_i32, %c0_i32_0, %c0_i32_1 : i32, i32, i32
  }
  func.func @transform_2(%arg0: i32) -> (i32, i32, i32) {
    %c0_i32 = arith.constant 0 : i32
    %c0_i32_0 = arith.constant 0 : i32
    %c0_i32_1 = arith.constant 0 : i32
    %c0_i32_2 = arith.constant 0 : i32
    return %c0_i32, %c0_i32_0, %c0_i32_1 : i32, i32, i32
  }
  func.func @transform_3(%arg0: i32) -> (i32, i32, i32) {
    %c0_i32 = arith.constant 0 : i32
    %c0_i32_0 = arith.constant 0 : i32
    %c0_i32_1 = arith.constant 0 : i32
    %c0_i32_2 = arith.constant 0 : i32
    return %c0_i32, %c0_i32_0, %c0_i32_1 : i32, i32, i32
  }
  func.func @transform_4(%arg0: i32) -> (i32, i32, i32) {
    %c0_i32 = arith.constant 0 : i32
    %c0_i32_0 = arith.constant 0 : i32
    %c0_i32_1 = arith.constant 0 : i32
    return %arg0, %c0_i32, %c0_i32_0 : i32, i32, i32
  }
}

</mosaic_0001>

<llo_original>
// kernel: tpu_custom_call.1
$region0: #{tpu_custom_call.1}
  #allocation0 [shape = 'u32[]', space=smem, size = 0x4, offset = 0x4, fixed_abs, tag = 'smem constant byte address 0x4 - core index']
  #allocation1 [shape = 'u32[72,128]{1,0:T(1,128)}', space=vmem, size = 0x9000, scoped, tag = 'internal scratch']
  %s0 = inlined_call_operand.vmem [shape: bf16[2,8,32], index: 0, kind: input, shape index: {}]
  %s1 = inlined_call_operand.vmem [shape: bf16[12,32,8], index: 1, kind: input, shape index: {}]
  %s2 = inlined_call_operand.vmem [shape: f32[12,1,8], index: 2, kind: input, shape index: {}]
  %s3 = inlined_call_operand.vmem [shape: bf16[4,8,32], index: 3, kind: input, shape index: {}]
  %s4 = inlined_call_operand.hbm [shape: f32[2,8,32], index: 4, kind: output, shape index: {}]
  %s5 = sld [smem:[#allocation0]]
  $region49: #{tpu_custom_call.1} parent=0
    _
  %s7 = ssub.s32 1, %s5
  %s8 = scalar_select 0, %s7, %s5
  $region1: #{tpu_custom_call.1} parent=0
    #allocation2 [shape = 'u8[8192]{0}', space=vmem, size = 0x2000, scoped, tag = 'output window, operand 0']
    #allocation3 [shape = 's32[2]{0}', space=sflag, size = 0x8, scoped, tag = 'scoped memory for tpu_custom_call.1']
    %9 = vsyncpa [#allocation3], 0
    %s10 = scalar_lea.sflag [#allocation3], 1
    %11 = vsyncpa %s10, 0
    loop: start=0, step=1, limit=4
    $region2: #{tpu_custom_call.1} parent=1 // loop_pre_header
      _
    $region3: #{tpu_custom_call.1} parent=1 // loop_header
      %s13 = sphi 0, %s17
      %p14 = scmp.ge.s32.totalorder %s13, 4
      %s23 = sphi 0, %s25
      %s26 = sphi 0, %s23
      %s27 = sphi 0, %s26
      %s43 = sphi 0, %s27
      %s47 = sphi 0, %s47
      %s49 = sphi 0, %s47
      %s50 = sphi 0, %s49
      %s64 = sphi 0, %s50
      %s68 = sphi 0, %s68
      %s70 = sphi 0, %s68
      %s71 = sphi 0, %s70
      %s85 = sphi 0, %s71
      %s89 = sphi 0, %s89
      %s91 = sphi 0, %s89
      %s92 = sphi 0, %s91
      %s106 = sphi 0, %s92
      %s112 = sphi 0, %s114
      %s115 = sphi 0, %s112
      %s116 = sphi 0, %s115
      %s132 = sphi 0, %s116
    $region4: #{tpu_custom_call.1} parent=1 // loop_header_branch
      %16 = sbr.rel (%p14) target = $region8
    $region5: #{tpu_custom_call.1} parent=1 // loop_body
      %s18 = ssub.s32 %s13, 1
      %s19 = ssub.s32 %s13, 2
      %s20 = sadd.s32 %s13, 1
      %s21 = ssub.s32 %s13, %s20
      %p22 = scmp.eq.s32.totalorder %s21, 0
      %s24 = sadd.s32 %s23, 1
      %s25 = scalar_select %p22, %s23, %s24
      %p28 = pneg %p22
      %p29 = scmp.eq.s32.totalorder %s13, 1
      %p30 = por %p28, %p29
      %p31 = scmp.ne.s32.totalorder %s23, %s26
      %p32 = scmp.eq.s32.totalorder %s13, 0
      %p33 = por %p31, %p32
      %p34 = scmp.ne.s32.totalorder %s23, %s26
      %p35 = scmp.eq.s32.totalorder %s18, 1
      %p36 = por %p34, %p35
      %p37 = scmp.ne.s32.totalorder %s26, %s27
      %p38 = scmp.eq.s32.totalorder %s18, 0
      %p39 = por %p37, %p38
      %p40 = scmp.ne.s32.totalorder %s26, %s27
      %p41 = scmp.eq.s32.totalorder %s19, 1
      %p42 = por %p40, %p41
      %p44 = scmp.ne.s32.totalorder %s27, %s43
      %p45 = scmp.eq.s32.totalorder %s19, 0
      %p46 = por %p44, %p45
      %s48 = sadd.s32 %s47, 1
      %p51 = scmp.eq.s32.totalorder %s13, 1
      %p52 = scmp.ne.s32.totalorder %s47, %s49
      %p53 = scmp.eq.s32.totalorder %s13, 0
      %p54 = por %p52, %p53
      %p55 = scmp.ne.s32.totalorder %s47, %s49
      %p56 = scmp.eq.s32.totalorder %s18, 1
      %p57 = por %p55, %p56
      %p58 = scmp.ne.s32.totalorder %s49, %s50
      %p59 = scmp.eq.s32.totalorder %s18, 0
      %p60 = por %p58, %p59
      %p61 = scmp.ne.s32.totalorder %s49, %s50
      %p62 = scmp.eq.s32.totalorder %s19, 1
      %p63 = por %p61, %p62
      %p65 = scmp.ne.s32.totalorder %s50, %s64
      %p66 = scmp.eq.s32.totalorder %s19, 0
      %p67 = por %p65, %p66
      %s69 = sadd.s32 %s68, 1
      %p72 = scmp.eq.s32.totalorder %s13, 1
      %p73 = scmp.ne.s32.totalorder %s68, %s70
      %p74 = scmp.eq.s32.totalorder %s13, 0
      %p75 = por %p73, %p74
      %p76 = scmp.ne.s32.totalorder %s68, %s70
      %p77 = scmp.eq.s32.totalorder %s18, 1
      %p78 = por %p76, %p77
      %p79 = scmp.ne.s32.totalorder %s70, %s71
      %p80 = scmp.eq.s32.totalorder %s18, 0
      %p81 = por %p79, %p80
      %p82 = scmp.ne.s32.totalorder %s70, %s71
      %p83 = scmp.eq.s32.totalorder %s19, 1
      %p84 = por %p82, %p83
      %p86 = scmp.ne.s32.totalorder %s71, %s85
      %p87 = scmp.eq.s32.totalorder %s19, 0
      %p88 = por %p86, %p87
      %s90 = sadd.s32 %s89, 1
      %p93 = scmp.eq.s32.totalorder %s13, 1
      %p94 = scmp.ne.s32.totalorder %s89, %s91
      %p95 = scmp.eq.s32.totalorder %s13, 0
      %p96 = por %p94, %p95
      %p97 = scmp.ne.s32.totalorder %s89, %s91
      %p98 = scmp.eq.s32.totalorder %s18, 1
      %p99 = por %p97, %p98
      %p100 = scmp.ne.s32.totalorder %s91, %s92
      %p101 = scmp.eq.s32.totalorder %s18, 0
      %p102 = por %p100, %p101
      %p103 = scmp.ne.s32.totalorder %s91, %s92
      %p104 = scmp.eq.s32.totalorder %s19, 1
      %p105 = por %p103, %p104
      %p107 = scmp.ne.s32.totalorder %s92, %s106
      %p108 = scmp.eq.s32.totalorder %s19, 0
      %p109 = por %p107, %p108
      %s110 = ssub.s32 %s13, %s20
      %p111 = scmp.eq.s32.totalorder %s110, 0
      %s113 = sadd.s32 %s112, 1
      %s114 = scalar_select %p111, %s112, %s113
      %p117 = pneg %p111
      %p118 = scmp.eq.s32.totalorder %s13, 1
      %p119 = por %p117, %p118
      %p120 = scmp.ne.s32.totalorder %s112, %s115
      %p121 = scmp.eq.s32.totalorder %s13, 0
      %p122 = por %p120, %p121
      %p123 = scmp.ne.s32.totalorder %s112, %s115
      %p124 = scmp.eq.s32.totalorder %s18, 1
      %p125 = por %p123, %p124
      %p126 = scmp.ne.s32.totalorder %s115, %s116
      %p127 = scmp.eq.s32.totalorder %s18, 0
      %p128 = por %p126, %p127
      %p129 = scmp.ne.s32.totalorder %s115, %s116
      %p130 = scmp.eq.s32.totalorder %s19, 1
      %p131 = por %p129, %p130
      %p133 = scmp.ne.s32.totalorder %s116, %s132
      %p134 = scmp.eq.s32.totalorder %s19, 0
      %p135 = por %p133, %p134
      %p136 = scmp.le.s32.totalorder 1, %s13
      %p137 = scmp.lt.s32.totalorder %s13, 3
      %p138 = pnand %p136, %p137
      %p139 = pneg %p138
      // Predicated region
      $region9: #{tpu_custom_call.1} parent=5 // pred_check
        _
      $region10: #{tpu_custom_call.1} parent=5 // pred_check_branch
        %141 = sbr.rel (%p138) target = $region12
      $region11: #{tpu_custom_call.1} parent=5 // pred_region
        %s142 = ssub.s32 %s13, 1
        // Predicated region
        $region13: #{tpu_custom_call.1} parent=11 // pred_check
          %p143 = pneg %p60
        $region14: #{tpu_custom_call.1} parent=11 // pred_check_branch
          %145 = sbr.rel (%p143) target = $region16
        $region15: #{tpu_custom_call.1} parent=11 // pred_region
          _
        $region16: #{tpu_custom_call.1} parent=11 // pred_fallthru
          _
        // Predicated region
        $region17: #{tpu_custom_call.1} parent=11 // pred_check
          %p146 = pneg %p81
        $region18: #{tpu_custom_call.1} parent=11 // pred_check_branch
          %148 = sbr.rel (%p146) target = $region20
        $region19: #{tpu_custom_call.1} parent=11 // pred_region
          _
        $region20: #{tpu_custom_call.1} parent=11 // pred_fallthru
          _
        // Predicated region
        $region21: #{tpu_custom_call.1} parent=11 // pred_check
          %p149 = pneg %p102
        $region22: #{tpu_custom_call.1} parent=11 // pred_check_branch
          %151 = sbr.rel (%p149) target = $region24
        $region23: #{tpu_custom_call.1} parent=11 // pred_region
          _
        $region24: #{tpu_custom_call.1} parent=11 // pred_fallthru
          _
      $region12: #{tpu_custom_call.1} parent=5 // pred_fallthru
        _
      %p152 = scmp.lt.s32.totalorder %s13, 2
      // Predicated region
      $region25: #{tpu_custom_call.1} parent=5 // pred_check
        %p153 = pneg %p152
      $region26: #{tpu_custom_call.1} parent=5 // pred_check_branch
        %155 = sbr.rel (%p153) target = $region28
      $region27: #{tpu_custom_call.1} parent=5 // pred_region
        // Predicated region
        $region29: #{tpu_custom_call.1} parent=27 // pred_check
          %p156 = pneg %p33
        $region30: #{tpu_custom_call.1} parent=27 // pred_check_branch
          %158 = sbr.rel (%p156) target = $region32
        $region31: #{tpu_custom_call.1} parent=27 // pred_region
          %p159 = scmp.lt.s32.totalorder %s13, 1
          %s160 = scalar_select %p159, %s13, 1
          %s161 = smul.addr %s160, 4
          %s162 = scalar_lea.vmem %s0, %s161
        $region32: #{tpu_custom_call.1} parent=27 // pred_fallthru
          _
      $region28: #{tpu_custom_call.1} parent=5 // pred_fallthru
        _
      %p163 = scmp.le.s32.totalorder 1, %s13
      %p164 = scmp.lt.s32.totalorder %s13, 3
      %p165 = pnand %p163, %p164
      %p166 = pneg %p165
      // Predicated region
      $region33: #{tpu_custom_call.1} parent=5 // pred_check
        _
      $region34: #{tpu_custom_call.1} parent=5 // pred_check_branch
        %168 = sbr.rel (%p165) target = $region36
      $region35: #{tpu_custom_call.1} parent=5 // pred_region
        %s169 = ssub.s32 %s13, 1
        %p170 = scmp.lt.s32.totalorder %s18, 1
        %s171 = scalar_select %p170, %s18, 1
        %s172 = smul.addr %s171, 4
        %s173 = scalar_lea.vmem %s0, %s172
        %p174 = pneg %p39
        %p175 = pneg %p36
        %p176 = pneg %p60
        %p177 = pneg %p57
        %p178 = pneg %p81
        %p179 = pneg %p78
        %p180 = pneg %p102
        %p181 = pneg %p99
        %p182 = pneg %p128
        %p183 = pneg %p125
        %s184 = sand.u32 %s115, 1
        %s185 = scalar_lea.sflag [#allocation3], %s184
        %s186 = sand.u32 %s115, 1
        %s187 = smul.addr %s186, 8
        %s188 = scalar_lea.vmem [#allocation2], %s187
        %p189 = scmp.lt.s32.totalorder %s18, 1
        %s190 = scalar_select %p189, %s18, 1
        %s191 = smul.addr %s190, 4
        %s192 = scalar_lea.vmem %s0, %s191
        %v194 = vld [vmem:[%s192] sm:$0xf]
        %v195 = vld [vmem:[%s1] sm:$0xf]
        %v196 = vld [vmem:[%s1 + $0x4] sm:$0xf]
        %v197 = vld [vmem:[%s1 + $0x8] sm:$0xf]
        %v198 = vld [vmem:[%s1 + $0xc] sm:$0xf]
        %v199 = vld [vmem:[%s1 + $0x10] sm:$0xf]
        %v200 = vld [vmem:[%s1 + $0x14] sm:$0xf]
        %v201 = vld [vmem:[%s1 + $0x18] sm:$0xf]
        %v202 = vld [vmem:[%s1 + $0x1c] sm:$0xf]
        %v203 = vld [vmem:[%s1 + $0x20] sm:$0xf]
        %v204 = vld [vmem:[%s1 + $0x24] sm:$0xf]
        %v205 = vld [vmem:[%s1 + $0x28] sm:$0xf]
        %v206 = vld [vmem:[%s1 + $0x2c] sm:$0xf]
        %v207 = vld [vmem:[%s1 + $0x30] sm:$0xf]
        %v208 = vld [vmem:[%s1 + $0x34] sm:$0xf]
        %v209 = vld [vmem:[%s1 + $0x38] sm:$0xf]
        %v210 = vld [vmem:[%s1 + $0x3c] sm:$0xf]
        %v211 = vld [vmem:[%s1 + $0x40] sm:$0xf]
        %v212 = vld [vmem:[%s1 + $0x44] sm:$0xf]
        %v213 = vld [vmem:[%s1 + $0x48] sm:$0xf]
        %v214 = vld [vmem:[%s1 + $0x4c] sm:$0xf]
        %v215 = vld [vmem:[%s1 + $0x50] sm:$0xf]
        %v216 = vld [vmem:[%s1 + $0x54] sm:$0xf]
        %v217 = vld [vmem:[%s1 + $0x58] sm:$0xf]
        %v218 = vld [vmem:[%s1 + $0x5c] sm:$0xf]
        %v219 = vld [vmem:[%s1 + $0x60] sm:$0xf]
        %v220 = vld [vmem:[%s1 + $0x64] sm:$0xf]
        %v221 = vld [vmem:[%s1 + $0x68] sm:$0xf]
        %v222 = vld [vmem:[%s1 + $0x6c] sm:$0xf]
        %v223 = vld [vmem:[%s1 + $0x70] sm:$0xf]
        %v224 = vld [vmem:[%s1 + $0x74] sm:$0xf]
        %v225 = vld [vmem:[%s1 + $0x78] sm:$0xf]
        %v226 = vld [vmem:[%s1 + $0x7c] sm:$0xf]
        %v227 = vld [vmem:[%s1 + $0x80] sm:$0xf]
        %v228 = vld [vmem:[%s1 + $0x84] sm:$0xf]
        %v229 = vld [vmem:[%s1 + $0x88] sm:$0xf]
        %v230 = vld [vmem:[%s1 + $0x8c] sm:$0xf]
        %v231 = vld [vmem:[%s1 + $0x90] sm:$0xf]
        %v232 = vld [vmem:[%s1 + $0x94] sm:$0xf]
        %v233 = vld [vmem:[%s1 + $0x98] sm:$0xf]
        %v234 = vld [vmem:[%s1 + $0x9c] sm:$0xf]
        %v235 = vld [vmem:[%s1 + $0xa0] sm:$0xf]
        %v236 = vld [vmem:[%s1 + $0xa4] sm:$0xf]
        %v237 = vld [vmem:[%s1 + $0xa8] sm:$0xf]
        %v238 = vld [vmem:[%s1 + $0xac] sm:$0xf]
        %v239 = vld [vmem:[%s1 + $0xb0] sm:$0xf]
        %v240 = vld [vmem:[%s1 + $0xb4] sm:$0xf]
        %v241 = vld [vmem:[%s1 + $0xb8] sm:$0xf]
        %v242 = vld [vmem:[%s1 + $0xbc] sm:$0xf]
        %v243 = vld [vmem:[%s2] sm:$0x1]
        %v244 = vld [vmem:[%s2 + $0x1] sm:$0x1]
        %v245 = vld [vmem:[%s2 + $0x2] sm:$0x1]
        %v246 = vld [vmem:[%s2 + $0x3] sm:$0x1]
        %v247 = vld [vmem:[%s2 + $0x4] sm:$0x1]
        %v248 = vld [vmem:[%s2 + $0x5] sm:$0x1]
        %v249 = vld [vmem:[%s2 + $0x6] sm:$0x1]
        %v250 = vld [vmem:[%s2 + $0x7] sm:$0x1]
        %v251 = vld [vmem:[%s2 + $0x8] sm:$0x1]
        %v252 = vld [vmem:[%s2 + $0x9] sm:$0x1]
        %v253 = vld [vmem:[%s2 + $0xa] sm:$0x1]
        %v254 = vld [vmem:[%s2 + $0xb] sm:$0x1]
        %v267 = vperm.slane %v243, 0
        %v268 = vperm.slane %v244, 0
        %v269 = vperm.slane %v245, 0
        %v270 = vperm.slane %v246, 0
        %v271 = vperm.slane %v247, 0
        %v272 = vperm.slane %v248, 0
        %v273 = vperm.slane %v249, 0
        %v274 = vperm.slane %v250, 0
        %v275 = vperm.slane %v251, 0
        %v276 = vperm.slane %v252, 0
        %v277 = vperm.slane %v253, 0
        %v278 = vperm.slane %v254, 0
        %v295 = vunpack.c.l.b16 %v195
        %v296 = vunpack.c.l.b16 %v196
        %v297 = vunpack.c.l.b16 %v197
        %v298 = vunpack.c.l.b16 %v198
        %v299 = vpack.c.b16 %v296, %v295
        %v300 = vpack.c.b16 %v298, %v297
        %vm303 = vcmask 261120
        %v305 = vsel %vm303, %v194, 0
        %307 = vmatpush.bf16.msra.mxu0 0
        %308 = vmatpush.bf16.msra.mxu0 0
        %309 = vmatpush.bf16.msra.mxu0 0
        %310 = vmatpush.bf16.msra.mxu0 0
        %311 = vmatpush.bf16.msra.mxu0 0
        %312 = vmatpush.bf16.msra.mxu0 0
        %313 = vmatpush.bf16.msra.mxu0 %v300
        %314 = vmatpush.bf16.msra.mxu0 %v299
        %315 = vmatmul.bf16.gmra.mxu0 %v305
        %v316 = vpop.f32.mrf.mxu0
        %v317 = vadd.f32 %v267, %v316
        %v318 = vpop.f32.mrf.mxu0
        %319 = vdwg.mxu0
        %v324 = vunpack.c.l.b16 %v199
        %v325 = vunpack.c.l.b16 %v200
        %v326 = vunpack.c.l.b16 %v201
        %v327 = vunpack.c.l.b16 %v202
        %v328 = vpack.c.b16 %v325, %v324
        %v329 = vpack.c.b16 %v327, %v326
        %332 = vmatpush.bf16.msra.mxu0 0
        %333 = vmatpush.bf16.msra.mxu0 0
        %334 = vmatpush.bf16.msra.mxu0 0
        %335 = vmatpush.bf16.msra.mxu0 0
        %336 = vmatpush.bf16.msra.mxu0 0
        %337 = vmatpush.bf16.msra.mxu0 0
        %338 = vmatpush.bf16.msra.mxu0 %v329
        %339 = vmatpush.bf16.msra.mxu0 %v328
        %340 = vmatmul.bf16.gmra.mxu0 %v305
        %v341 = vpop.f32.mrf.mxu0
        %v342 = vadd.f32 %v268, %v341
        %v343 = vpop.f32.mrf.mxu0
        %344 = vdwg.mxu0
        %v349 = vunpack.c.l.b16 %v203
        %v350 = vunpack.c.l.b16 %v204
        %v351 = vunpack.c.l.b16 %v205
        %v352 = vunpack.c.l.b16 %v206
        %v353 = vpack.c.b16 %v350, %v349
        %v354 = vpack.c.b16 %v352, %v351
        %357 = vmatpush.bf16.msra.mxu0 0
        %358 = vmatpush.bf16.msra.mxu0 0
        %359 = vmatpush.bf16.msra.mxu0 0
        %360 = vmatpush.bf16.msra.mxu0 0
        %361 = vmatpush.bf16.msra.mxu0 0
        %362 = vmatpush.bf16.msra.mxu0 0
        %363 = vmatpush.bf16.msra.mxu0 %v354
        %364 = vmatpush.bf16.msra.mxu0 %v353
        %365 = vmatmul.bf16.gmra.mxu0 %v305
        %v366 = vpop.f32.mrf.mxu0
        %v367 = vadd.f32 %v269, %v366
        %v368 = vpop.f32.mrf.mxu0
        %369 = vdwg.mxu0
        %v374 = vunpack.c.l.b16 %v207
        %v375 = vunpack.c.l.b16 %v208
        %v376 = vunpack.c.l.b16 %v209
        %v377 = vunpack.c.l.b16 %v210
        %v378 = vpack.c.b16 %v375, %v374
        %v379 = vpack.c.b16 %v377, %v376
        %382 = vmatpush.bf16.msra.mxu0 0
        %383 = vmatpush.bf16.msra.mxu0 0
        %384 = vmatpush.bf16.msra.mxu0 0
        %385 = vmatpush.bf16.msra.mxu0 0
        %386 = vmatpush.bf16.msra.mxu0 0
        %387 = vmatpush.bf16.msra.mxu0 0
        %388 = vmatpush.bf16.msra.mxu0 %v379
        %389 = vmatpush.bf16.msra.mxu0 %v378
        %390 = vmatmul.bf16.gmra.mxu0 %v305
        %v391 = vpop.f32.mrf.mxu0
        %v392 = vadd.f32 %v270, %v391
        %v393 = vpop.f32.mrf.mxu0
        %394 = vdwg.mxu0
        %v399 = vunpack.c.l.b16 %v211
        %v400 = vunpack.c.l.b16 %v212
        %v401 = vunpack.c.l.b16 %v213
        %v402 = vunpack.c.l.b16 %v214
        %v403 = vpack.c.b16 %v400, %v399
        %v404 = vpack.c.b16 %v402, %v401
        %407 = vmatpush.bf16.msra.mxu0 0
        %408 = vmatpush.bf16.msra.mxu0 0
        %409 = vmatpush.bf16.msra.mxu0 0
        %410 = vmatpush.bf16.msra.mxu0 0
        %411 = vmatpush.bf16.msra.mxu0 0
        %412 = vmatpush.bf16.msra.mxu0 0
        %413 = vmatpush.bf16.msra.mxu0 %v404
        %414 = vmatpush.bf16.msra.mxu0 %v403
        %415 = vmatmul.bf16.gmra.mxu0 %v305
        %v416 = vpop.f32.mrf.mxu0
        %v417 = vadd.f32 %v271, %v416
        %v418 = vpop.f32.mrf.mxu0
        %419 = vdwg.mxu0
        %v424 = vunpack.c.l.b16 %v215
        %v425 = vunpack.c.l.b16 %v216
        %v426 = vunpack.c.l.b16 %v217
        %v427 = vunpack.c.l.b16 %v218
        %v428 = vpack.c.b16 %v425, %v424
        %v429 = vpack.c.b16 %v427, %v426
        %432 = vmatpush.bf16.msra.mxu0 0
        %433 = vmatpush.bf16.msra.mxu0 0
        %434 = vmatpush.bf16.msra.mxu0 0
        %435 = vmatpush.bf16.msra.mxu0 0
        %436 = vmatpush.bf16.msra.mxu0 0
        %437 = vmatpush.bf16.msra.mxu0 0
        %438 = vmatpush.bf16.msra.mxu0 %v429
        %439 = vmatpush.bf16.msra.mxu0 %v428
        %440 = vmatmul.bf16.gmra.mxu0 %v305
        %v441 = vpop.f32.mrf.mxu0
        %v442 = vadd.f32 %v272, %v441
        %v443 = vpop.f32.mrf.mxu0
        %444 = vdwg.mxu0
        %v449 = vunpack.c.l.b16 %v219
        %v450 = vunpack.c.l.b16 %v220
        %v451 = vunpack.c.l.b16 %v221
        %v452 = vunpack.c.l.b16 %v222
        %v453 = vpack.c.b16 %v450, %v449
        %v454 = vpack.c.b16 %v452, %v451
        %457 = vmatpush.bf16.msra.mxu0 0
        %458 = vmatpush.bf16.msra.mxu0 0
        %459 = vmatpush.bf16.msra.mxu0 0
        %460 = vmatpush.bf16.msra.mxu0 0
        %461 = vmatpush.bf16.msra.mxu0 0
        %462 = vmatpush.bf16.msra.mxu0 0
        %463 = vmatpush.bf16.msra.mxu0 %v454
        %464 = vmatpush.bf16.msra.mxu0 %v453
        %465 = vmatmul.bf16.gmra.mxu0 %v305
        %v466 = vpop.f32.mrf.mxu0
        %v467 = vadd.f32 %v273, %v466
        %v468 = vpop.f32.mrf.mxu0
        %469 = vdwg.mxu0
        %v474 = vunpack.c.l.b16 %v223
        %v475 = vunpack.c.l.b16 %v224
        %v476 = vunpack.c.l.b16 %v225
        %v477 = vunpack.c.l.b16 %v226
        %v478 = vpack.c.b16 %v475, %v474
        %v479 = vpack.c.b16 %v477, %v476
        %482 = vmatpush.bf16.msra.mxu0 0
        %483 = vmatpush.bf16.msra.mxu0 0
        %484 = vmatpush.bf16.msra.mxu0 0
        %485 = vmatpush.bf16.msra.mxu0 0
        %486 = vmatpush.bf16.msra.mxu0 0
        %487 = vmatpush.bf16.msra.mxu0 0
        %488 = vmatpush.bf16.msra.mxu0 %v479
        %489 = vmatpush.bf16.msra.mxu0 %v478
        %490 = vmatmul.bf16.gmra.mxu0 %v305
        %v491 = vpop.f32.mrf.mxu0
        %v492 = vadd.f32 %v274, %v491
        %v493 = vpop.f32.mrf.mxu0
        %494 = vdwg.mxu0
        %v499 = vunpack.c.l.b16 %v227
        %v500 = vunpack.c.l.b16 %v228
        %v501 = vunpack.c.l.b16 %v229
        %v502 = vunpack.c.l.b16 %v230
        %v503 = vpack.c.b16 %v500, %v499
        %v504 = vpack.c.b16 %v502, %v501
        %507 = vmatpush.bf16.msra.mxu0 0
        %508 = vmatpush.bf16.msra.mxu0 0
        %509 = vmatpush.bf16.msra.mxu0 0
        %510 = vmatpush.bf16.msra.mxu0 0
        %511 = vmatpush.bf16.msra.mxu0 0
        %512 = vmatpush.bf16.msra.mxu0 0
        %513 = vmatpush.bf16.msra.mxu0 %v504
        %514 = vmatpush.bf16.msra.mxu0 %v503
        %515 = vmatmul.bf16.gmra.mxu0 %v305
        %v516 = vpop.f32.mrf.mxu0
        %v517 = vadd.f32 %v275, %v516
        %v518 = vpop.f32.mrf.mxu0
        %519 = vdwg.mxu0
        %v524 = vunpack.c.l.b16 %v231
        %v525 = vunpack.c.l.b16 %v232
        %v526 = vunpack.c.l.b16 %v233
        %v527 = vunpack.c.l.b16 %v234
        %v528 = vpack.c.b16 %v525, %v524
        %v529 = vpack.c.b16 %v527, %v526
        %532 = vmatpush.bf16.msra.mxu0 0
        %533 = vmatpush.bf16.msra.mxu0 0
        %534 = vmatpush.bf16.msra.mxu0 0
        %535 = vmatpush.bf16.msra.mxu0 0
        %536 = vmatpush.bf16.msra.mxu0 0
        %537 = vmatpush.bf16.msra.mxu0 0
        %538 = vmatpush.bf16.msra.mxu0 %v529
        %539 = vmatpush.bf16.msra.mxu0 %v528
        %540 = vmatmul.bf16.gmra.mxu0 %v305
        %v541 = vpop.f32.mrf.mxu0
        %v542 = vadd.f32 %v276, %v541
        %v543 = vpop.f32.mrf.mxu0
        %544 = vdwg.mxu0
        %v549 = vunpack.c.l.b16 %v235
        %v550 = vunpack.c.l.b16 %v236
        %v551 = vunpack.c.l.b16 %v237
        %v552 = vunpack.c.l.b16 %v238
        %v553 = vpack.c.b16 %v550, %v549
        %v554 = vpack.c.b16 %v552, %v551
        %557 = vmatpush.bf16.msra.mxu0 0
        %558 = vmatpush.bf16.msra.mxu0 0
        %559 = vmatpush.bf16.msra.mxu0 0
        %560 = vmatpush.bf16.msra.mxu0 0
        %561 = vmatpush.bf16.msra.mxu0 0
        %562 = vmatpush.bf16.msra.mxu0 0
        %563 = vmatpush.bf16.msra.mxu0 %v554
        %564 = vmatpush.bf16.msra.mxu0 %v553
        %565 = vmatmul.bf16.gmra.mxu0 %v305
        %v566 = vpop.f32.mrf.mxu0
        %v567 = vadd.f32 %v277, %v566
        %v568 = vpop.f32.mrf.mxu0
        %569 = vdwg.mxu0
        %v574 = vunpack.c.l.b16 %v239
        %v575 = vunpack.c.l.b16 %v240
        %v576 = vunpack.c.l.b16 %v241
        %v577 = vunpack.c.l.b16 %v242
        %v578 = vpack.c.b16 %v575, %v574
        %v579 = vpack.c.b16 %v577, %v576
        %582 = vmatpush.bf16.msra.mxu0 0
        %583 = vmatpush.bf16.msra.mxu0 0
        %584 = vmatpush.bf16.msra.mxu0 0
        %585 = vmatpush.bf16.msra.mxu0 0
        %586 = vmatpush.bf16.msra.mxu0 0
        %587 = vmatpush.bf16.msra.mxu0 0
        %588 = vmatpush.bf16.msra.mxu0 %v579
        %589 = vmatpush.bf16.msra.mxu0 %v578
        %590 = vmatmul.bf16.gmra.mxu0 %v305
        %v591 = vpop.f32.mrf.mxu0
        %v592 = vadd.f32 %v278, %v591
        %v593 = vpop.f32.mrf.mxu0
        %594 = vdwg.mxu0
        %v595 = vpack.c.bf16 %v317, %v317
        %v596 = vpack.c.bf16 %v342, %v342
        %v597 = vpack.c.bf16 %v367, %v367
        %v598 = vpack.c.bf16 %v392, %v392
        %v599 = vpack.c.bf16 %v417, %v417
        %v600 = vpack.c.bf16 %v442, %v442
        %v601 = vpack.c.bf16 %v467, %v467
        %v602 = vpack.c.bf16 %v492, %v492
        %v603 = vpack.c.bf16 %v517, %v517
        %v604 = vpack.c.bf16 %v542, %v542
        %v605 = vpack.c.bf16 %v567, %v567
        %v606 = vpack.c.bf16 %v592, %v592
        %vm607 = vcmask 64512
        %v609 = vsel %vm607, %v595, 0
        %v612 = vsel %vm607, %v599, 0
        %614 = vmatpush.bf16.xpose.msra.mxu0 0
        %615 = vmatpush.bf16.xpose.msra.mxu0 0
        %616 = vmatpush.bf16.xpose.msra.mxu0 0
        %617 = vmatpush.bf16.xpose.msra.mxu0 0
        %618 = vmatpush.bf16.xpose.msra.mxu0 0
        %619 = vmatpush.bf16.xpose.msra.mxu0 0
        %620 = vmatpush.bf16.xpose.msra.mxu0 0
        %621 = vmatpush.bf16.xpose.msra.mxu0 %v612
        %622 = vmatmul.bf16.gmra.mxu0 %v609
        %v623 = vpop.f32.mrf.mxu0
        %v624 = vadd.f32 0.0, %v623
        %v625 = vpop.f32.mrf.mxu0
        %626 = vdwg.mxu0
        %v628 = vsel %vm607, %v596, 0
        %v631 = vsel %vm607, %v600, 0
        %633 = vmatpush.bf16.xpose.msra.mxu0 0
        %634 = vmatpush.bf16.xpose.msra.mxu0 0
        %635 = vmatpush.bf16.xpose.msra.mxu0 0
        %636 = vmatpush.bf16.xpose.msra.mxu0 0
        %637 = vmatpush.bf16.xpose.msra.mxu0 0
        %638 = vmatpush.bf16.xpose.msra.mxu0 0
        %639 = vmatpush.bf16.xpose.msra.mxu0 0
        %640 = vmatpush.bf16.xpose.msra.mxu0 %v631
        %641 = vmatmul.bf16.gmra.mxu0 %v628
        %v642 = vpop.f32.mrf.mxu0
        %v643 = vadd.f32 0.0, %v642
        %v644 = vpop.f32.mrf.mxu0
        %645 = vdwg.mxu0
        %v647 = vsel %vm607, %v597, 0
        %v650 = vsel %vm607, %v601, 0
        %652 = vmatpush.bf16.xpose.msra.mxu0 0
        %653 = vmatpush.bf16.xpose.msra.mxu0 0
        %654 = vmatpush.bf16.xpose.msra.mxu0 0
        %655 = vmatpush.bf16.xpose.msra.mxu0 0
        %656 = vmatpush.bf16.xpose.msra.mxu0 0
        %657 = vmatpush.bf16.xpose.msra.mxu0 0
        %658 = vmatpush.bf16.xpose.msra.mxu0 0
        %659 = vmatpush.bf16.xpose.msra.mxu0 %v650
        %660 = vmatmul.bf16.gmra.mxu0 %v647
        %v661 = vpop.f32.mrf.mxu0
        %v662 = vadd.f32 0.0, %v661
        %v663 = vpop.f32.mrf.mxu0
        %664 = vdwg.mxu0
        %v666 = vsel %vm607, %v598, 0
        %v669 = vsel %vm607, %v602, 0
        %671 = vmatpush.bf16.xpose.msra.mxu0 0
        %672 = vmatpush.bf16.xpose.msra.mxu0 0
        %673 = vmatpush.bf16.xpose.msra.mxu0 0
        %674 = vmatpush.bf16.xpose.msra.mxu0 0
        %675 = vmatpush.bf16.xpose.msra.mxu0 0
        %676 = vmatpush.bf16.xpose.msra.mxu0 0
        %677 = vmatpush.bf16.xpose.msra.mxu0 0
        %678 = vmatpush.bf16.xpose.msra.mxu0 %v669
        %679 = vmatmul.bf16.gmra.mxu0 %v666
        %v680 = vpop.f32.mrf.mxu0
        %v681 = vadd.f32 0.0, %v680
        %v682 = vpop.f32.mrf.mxu0
        %683 = vdwg.mxu0
        %v684 = vsel %vm607, %v624, -inf
        %685 = vmax.xlane.f32.xlu0 %v684
        %v686 = vpop.xlane.xlu0 %685
        %v687 = vsel %vm607, %v643, -inf
        %688 = vmax.xlane.f32.xlu0 %v687
        %v689 = vpop.xlane.xlu0 %688
        %v690 = vsel %vm607, %v662, -inf
        %691 = vmax.xlane.f32.xlu0 %v690
        %v692 = vpop.xlane.xlu0 %691
        %v693 = vsel %vm607, %v681, -inf
        %694 = vmax.xlane.f32.xlu0 %v693
        %v695 = vpop.xlane.xlu0 %694
        %v696 = vsub.f32 %v624, %v686
        %v697 = vsub.f32 %v643, %v689
        %v698 = vsub.f32 %v662, %v692
        %v699 = vsub.f32 %v681, %v695
        %v700 = vmul.f32 %v696, 1.442695
        %v701 = vpow.pop %v700
        %v702 = vmul.f32 %v697, 1.442695
        %v703 = vpow.pop %v702
        %v704 = vmul.f32 %v698, 1.442695
        %v705 = vpow.pop %v704
        %v706 = vmul.f32 %v699, 1.442695
        %v707 = vpow.pop %v706
        %v708 = vsel %vm607, %v701, 0.0
        %709 = vadd.xlane.f32.xlu0 %v708
        %v710 = vpop.xlane.xlu0 %709
        %v711 = vsel %vm607, %v703, 0.0
        %712 = vadd.xlane.f32.xlu0 %v711
        %v713 = vpop.xlane.xlu0 %712
        %v714 = vsel %vm607, %v705, 0.0
        %715 = vadd.xlane.f32.xlu0 %v714
        %v716 = vpop.xlane.xlu0 %715
        %v717 = vsel %vm607, %v707, 0.0
        %718 = vadd.xlane.f32.xlu0 %v717
        %v719 = vpop.xlane.xlu0 %718
        %v720 = vpack.c.bf16 %v701, %v701
        %v721 = vpack.c.bf16 %v703, %v703
        %v722 = vpack.c.bf16 %v705, %v705
        %v723 = vpack.c.bf16 %v707, %v707
        %v725 = vsel %vm607, %v720, 0
        %vm727 = vcmask 1043456
        %v729 = vsel %vm727, %v603, 0
        %731 = vmatpush.bf16.msra.mxu0 0
        %732 = vmatpush.bf16.msra.mxu0 0
        %733 = vmatpush.bf16.msra.mxu0 0
        %734 = vmatpush.bf16.msra.mxu0 0
        %735 = vmatpush.bf16.msra.mxu0 0
        %736 = vmatpush.bf16.msra.mxu0 0
        %737 = vmatpush.bf16.msra.mxu0 0
        %738 = vmatpush.bf16.msra.mxu0 %v729
        %739 = vmatmul.bf16.gmra.mxu0 %v725
        %v740 = vpop.f32.mrf.mxu0
        %v741 = vadd.f32 0.0, %v740
        %v742 = vpop.f32.mrf.mxu0
        %743 = vdwg.mxu0
        %v745 = vsel %vm607, %v721, 0
        %v748 = vsel %vm727, %v604, 0
        %750 = vmatpush.bf16.msra.mxu0 0
        %751 = vmatpush.bf16.msra.mxu0 0
        %752 = vmatpush.bf16.msra.mxu0 0
        %753 = vmatpush.bf16.msra.mxu0 0
        %754 = vmatpush.bf16.msra.mxu0 0
        %755 = vmatpush.bf16.msra.mxu0 0
        %756 = vmatpush.bf16.msra.mxu0 0
        %757 = vmatpush.bf16.msra.mxu0 %v748
        %758 = vmatmul.bf16.gmra.mxu0 %v745
        %v759 = vpop.f32.mrf.mxu0
        %v760 = vadd.f32 0.0, %v759
        %v761 = vpop.f32.mrf.mxu0
        %762 = vdwg.mxu0
        %v764 = vsel %vm607, %v722, 0
        %v767 = vsel %vm727, %v605, 0
        %769 = vmatpush.bf16.msra.mxu0 0
        %770 = vmatpush.bf16.msra.mxu0 0
        %771 = vmatpush.bf16.msra.mxu0 0
        %772 = vmatpush.bf16.msra.mxu0 0
        %773 = vmatpush.bf16.msra.mxu0 0
        %774 = vmatpush.bf16.msra.mxu0 0
        %775 = vmatpush.bf16.msra.mxu0 0
        %776 = vmatpush.bf16.msra.mxu0 %v767
        %777 = vmatmul.bf16.gmra.mxu0 %v764
        %v778 = vpop.f32.mrf.mxu0
        %v779 = vadd.f32 0.0, %v778
        %v780 = vpop.f32.mrf.mxu0
        %781 = vdwg.mxu0
        %v783 = vsel %vm607, %v723, 0
        %v786 = vsel %vm727, %v606, 0
        %788 = vmatpush.bf16.msra.mxu0 0
        %789 = vmatpush.bf16.msra.mxu0 0
        %790 = vmatpush.bf16.msra.mxu0 0
        %791 = vmatpush.bf16.msra.mxu0 0
        %792 = vmatpush.bf16.msra.mxu0 0
        %793 = vmatpush.bf16.msra.mxu0 0
        %794 = vmatpush.bf16.msra.mxu0 0
        %795 = vmatpush.bf16.msra.mxu0 %v786
        %796 = vmatmul.bf16.gmra.mxu0 %v783
        %v797 = vpop.f32.mrf.mxu0
        %v798 = vadd.f32 0.0, %v797
        %v799 = vpop.f32.mrf.mxu0
        %800 = vdwg.mxu0
        %v801 = vrcp.pop %v710
        %v802 = vrcp.pop %v713
        %v803 = vrcp.pop %v716
        %v804 = vrcp.pop %v719
        %v805 = vmul.f32 %v741, %v801
        %v806 = vmul.f32 %v760, %v802
        %v807 = vmul.f32 %v779, %v803
        %v808 = vmul.f32 %v798, %v804
        %v809 = vpack.c.bf16 %v805, %v805
        %v810 = vpack.c.bf16 %v806, %v806
        %v811 = vpack.c.bf16 %v807, %v807
        %v812 = vpack.c.bf16 %v808, %v808
        %v813 = vld [vmem:[%s3] sm:$0xf]
        %v814 = vld [vmem:[%s3 + $0x4] sm:$0xf]
        %v815 = vld [vmem:[%s3 + $0x8] sm:$0xf]
        %v816 = vld [vmem:[%s3 + $0xc] sm:$0xf]
        %v818 = vsel %vm607, %v809, 0
        %v821 = vsel %vm727, %v813, 0
        %823 = vmatpush.bf16.msra.mxu0 0
        %824 = vmatpush.bf16.msra.mxu0 0
        %825 = vmatpush.bf16.msra.mxu0 0
        %826 = vmatpush.bf16.msra.mxu0 0
        %827 = vmatpush.bf16.msra.mxu0 0
        %828 = vmatpush.bf16.msra.mxu0 0
        %829 = vmatpush.bf16.msra.mxu0 0
        %830 = vmatpush.bf16.msra.mxu0 %v821
        %831 = vmatmul.bf16.gmra.mxu0 %v818
        %v832 = vpop.f32.mrf.mxu0
        %v833 = vadd.f32 0.0, %v832
        %v834 = vpop.f32.mrf.mxu0
        %835 = vdwg.mxu0
        %v837 = vsel %vm607, %v810, 0
        %v840 = vsel %vm727, %v814, 0
        %842 = vmatpush.bf16.msra.mxu0 0
        %843 = vmatpush.bf16.msra.mxu0 0
        %844 = vmatpush.bf16.msra.mxu0 0
        %845 = vmatpush.bf16.msra.mxu0 0
        %846 = vmatpush.bf16.msra.mxu0 0
        %847 = vmatpush.bf16.msra.mxu0 0
        %848 = vmatpush.bf16.msra.mxu0 0
        %849 = vmatpush.bf16.msra.mxu0 %v840
        %850 = vmatmul.bf16.gmra.mxu0 %v837
        %v851 = vpop.f32.mrf.mxu0
        %v852 = vadd.f32 0.0, %v851
        %v853 = vpop.f32.mrf.mxu0
        %854 = vdwg.mxu0
        %v856 = vsel %vm607, %v811, 0
        %v859 = vsel %vm727, %v815, 0
        %861 = vmatpush.bf16.msra.mxu0 0
        %862 = vmatpush.bf16.msra.mxu0 0
        %863 = vmatpush.bf16.msra.mxu0 0
        %864 = vmatpush.bf16.msra.mxu0 0
        %865 = vmatpush.bf16.msra.mxu0 0
        %866 = vmatpush.bf16.msra.mxu0 0
        %867 = vmatpush.bf16.msra.mxu0 0
        %868 = vmatpush.bf16.msra.mxu0 %v859
        %869 = vmatmul.bf16.gmra.mxu0 %v856
        %v870 = vpop.f32.mrf.mxu0
        %v871 = vadd.f32 0.0, %v870
        %v872 = vpop.f32.mrf.mxu0
        %873 = vdwg.mxu0
        %v875 = vsel %vm607, %v812, 0
        %v878 = vsel %vm727, %v816, 0
        %880 = vmatpush.bf16.msra.mxu0 0
        %881 = vmatpush.bf16.msra.mxu0 0
        %882 = vmatpush.bf16.msra.mxu0 0
        %883 = vmatpush.bf16.msra.mxu0 0
        %884 = vmatpush.bf16.msra.mxu0 0
        %885 = vmatpush.bf16.msra.mxu0 0
        %886 = vmatpush.bf16.msra.mxu0 0
        %887 = vmatpush.bf16.msra.mxu0 %v878
        %888 = vmatmul.bf16.gmra.mxu0 %v875
        %v889 = vpop.f32.mrf.mxu0
        %v890 = vadd.f32 0.0, %v889
        %v891 = vpop.f32.mrf.mxu0
        %892 = vdwg.mxu0
        %v893 = vsel %vm303, %v833, 0.0
        %v894 = vsel %vm303, %v852, 0.0
        %v895 = vadd.f32 %v893, %v894
        %v896 = vsel %vm303, %v871, 0.0
        %v897 = vadd.f32 %v895, %v896
        %v898 = vsel %vm303, %v890, 0.0
        %v899 = vadd.f32 %v897, %v898
        %900 = vst.msk [vmem:[%s188] sm:$0xff] %vm303, %v899
        %s901 = sand.u32 %s115, 1
        %s902 = scalar_lea.sflag [#allocation3], %s901
        %s903 = sand.u32 %s115, 1
        %s904 = smul.addr %s903, 8
        %s905 = scalar_lea.vmem [#allocation2], %s904
        // Predicated region
        $region37: #{tpu_custom_call.1} parent=35 // pred_check
          %p906 = pneg %p125
        $region38: #{tpu_custom_call.1} parent=35 // pred_check_branch
          %908 = sbr.rel (%p906) target = $region40
        $region39: #{tpu_custom_call.1} parent=35 // pred_region
          %910 = vsyncadd %s902, 0
          %s911 = smul.addr %s18, 8
          %s912 = scalar_lea.hbm %s4, %s911
          %s914 = sshll.u32 %s905, 4
          %s915 = int_to_ptr.vmem [resolvable:$true] %s914
          %s916 = sshll.u32 %s912, 4
          %s917 = int_to_ptr.hbm [resolvable:$true] %s916
          %919 = dma.vmem_to_hbm [thread:$0]  %s915, 128, %s917, %s902
        $region40: #{tpu_custom_call.1} parent=35 // pred_fallthru
          _
      $region36: #{tpu_custom_call.1} parent=5 // pred_fallthru
        _
      %p920 = scmp.le.s32.totalorder 2, %s13
      // Predicated region
      $region41: #{tpu_custom_call.1} parent=5 // pred_check
        %p921 = pneg %p920
      $region42: #{tpu_custom_call.1} parent=5 // pred_check_branch
        %923 = sbr.rel (%p921) target = $region44
      $region43: #{tpu_custom_call.1} parent=5 // pred_region
        %s924 = ssub.s32 %s13, 2
        // Predicated region
        $region45: #{tpu_custom_call.1} parent=43 // pred_check
          %p925 = pneg %p131
        $region46: #{tpu_custom_call.1} parent=43 // pred_check_branch
          %927 = sbr.rel (%p925) target = $region48
        $region47: #{tpu_custom_call.1} parent=43 // pred_region
          %s928 = sand.u32 %s116, 1
          %s929 = scalar_lea.sflag [#allocation3], %s928
          %s930 = sand.u32 %s116, 1
          %s931 = smul.addr %s930, 8
          %s932 = scalar_lea.vmem [#allocation2], %s931
          %934 = dma.done %s929, 128
        $region48: #{tpu_custom_call.1} parent=43 // pred_fallthru
          _
      $region44: #{tpu_custom_call.1} parent=5 // pred_fallthru
        _
    $region6: #{tpu_custom_call.1} parent=1 // loop_footer
      %s17 = sadd.s32 1, %s13
    $region7: #{tpu_custom_call.1} parent=1 // loop_footer_branch
      %12 = sbr.rel target = $region3
    $region8: #{tpu_custom_call.1} parent=1 // loop_exit
      _
    %935 = vsyncpa [#allocation3], 1
    %s936 = scalar_lea.sflag [#allocation3], 1
    %937 = vsyncpa %s936, 1

</llo_original>
